<compile_context>
chip_gen: v7x
topology: tpu7x:2x2x1
jax: 0.10.0
libtpu: 0.0.40
codegen_flags: <defaults>
</compile_context>

<pallas_src>
import jax
import jax.numpy as jnp
from jax.experimental import pallas as pl
from jax.experimental.pallas import tpu as pltpu


def _cat_tanh_kernel(x_ref, o_ref):
    # x_ref: (TB, CL) lane-dense input tile
    # o_ref: (TB, 2*CL) lane-dense output tile
    cl = x_ref.shape[-1]
    # f32 compute is correct everywhere (v5e has no bf16 EUP); for f32 inputs
    # the upcast is a no-op.  TODO(synk): skip the upcast for bf16 I/O on
    # v6e/v7x if the surrounding model moves to bf16 (halves HBM traffic).
    xt = jnp.tanh(x_ref[...].astype(jnp.float32)).astype(o_ref.dtype)
    # Duplicate along the lane axis with two stores from the same vregs.
    o_ref[:, :cl] = xt
    o_ref[:, cl:] = xt


def _choose_row_tile(b, cl, itemsize, vmem_budget=24 << 20):
    """Largest multiple-of-8 row tile that divides b and fits the VMEM budget.

    Per grid step (double-buffered): 2*(tb*cl) in + 2*(tb*2*cl) out
      = 6 * tb * cl * itemsize bytes.  Budget 24 MiB leaves headroom under the
    32 MiB default scoped limit and is safe for v7x's 64 MiB physical VMEM.
    """
    if b % 8 != 0:
        return b  # single full block (toy / ragged batch sizes)
    per_row = 6 * cl * itemsize
    cap_rows = max(8, vmem_budget // max(per_row, 1))
    start = min(b, (cap_rows // 8) * 8)
    for cand in range(start, 0, -8):
        if b % cand == 0:
            return cand
    return b


def model_forward(x):
    """Equivalent of: torch.cat((x, x), dim=1).view(-1).tanh()"""
    b, c, l = x.shape
    cl = c * l
    dtype = x.dtype
    itemsize = jnp.dtype(dtype).itemsize

    x2d = x.reshape(b, cl)  # lane-dense 2-D view (layout plumbing, free)

    tb = _choose_row_tile(b, cl, itemsize)

    # Hard size guard for the full-block fallback (instead of a late compile
    # failure): the per-step footprint must fit comfortably in scoped VMEM.
    if tb == b and 6 * b * cl * itemsize > (48 << 20):
        raise ValueError(
            "cat+tanh kernel: batch not a multiple of 8 and full-array block "
            "exceeds the VMEM budget; pad the batch or add a column grid."
        )

    grid = (b // tb,)
    out = pl.pallas_call(
        _cat_tanh_kernel,
        out_shape=jax.ShapeDtypeStruct((b, 2 * cl), dtype),
        grid=grid,
        in_specs=[pl.BlockSpec((tb, cl), lambda i: (i, 0))],
        out_specs=pl.BlockSpec((tb, 2 * cl), lambda i: (i, 0)),
        compiler_params=pltpu.CompilerParams(
            dimension_semantics=("parallel",),  # megacore split on v7x
        ),
    )(x2d)

    # Row-major flatten of (B, 2*CL) == torch.cat((x, x), 1).view(-1) order.
    return out.reshape(-1)
    # NOTE: at the 48-element toy size this call is pure launch overhead; a
    # production wrapper would gate the Pallas path behind a size threshold
    # and use plain jnp.tanh for tiny inputs.


if __name__ == "__main__":
    key = jax.random.PRNGKey(0)
    x = jax.random.normal(key, (2, 3, 4), dtype=jnp.float32)

    y = model_forward(x)
    jax.block_until_ready(y)

    # Reference check in plain JAX (mirrors the torch module exactly).
    ref = jnp.tanh(jnp.concatenate([x, x], axis=1).reshape(-1))
    assert y.shape == (48,)
    assert jnp.allclose(y, ref, atol=1e-6), "mismatch vs reference"

    print("KERNEL_OK")
</pallas_src>

<mosaic_0001>
module attributes {stable_mosaic.version = 11 : i64} {
  func.func @_cat_tanh_kernel(%arg0: i32, %arg1: memref<2x12xf32, #tpu.memory_space<vmem>>, %arg2: memref<2x24xf32, #tpu.memory_space<vmem>>) attributes {dimension_semantics = [#tpu.dimension_semantics<parallel>], iteration_bounds = array<i64: 1>, scalar_prefetch = 0 : i64, scratch_operands = 0 : i64, tpu.core_type = #tpu.core_type<tc>, window_params = [{transform_indices = @transform_0, window_bounds = array<i64: 2, 12>}, {transform_indices = @transform_1, window_bounds = array<i64: 2, 24>}]} {
    %c0 = arith.constant 0 : index
    %c0_0 = arith.constant 0 : index
    %0 = vector.load %arg1[%c0, %c0_0] : memref<2x12xf32, #tpu.memory_space<vmem>>, vector<2x12xf32>
    %1 = math.tanh %0 : vector<2x12xf32>
    %c0_1 = arith.constant 0 : index
    %c0_2 = arith.constant 0 : index
    %2 = vector.load %arg2[%c0_1, %c0_2] : memref<2x24xf32, #tpu.memory_space<vmem>>, vector<2x12xf32>
    tpu.vector_store %arg2[%c0_1, %c0_2], %1 {strides = array<i32>} : memref<2x24xf32, #tpu.memory_space<vmem>>, vector<2x12xf32>,
    %c0_3 = arith.constant 0 : index
    %c12 = arith.constant 12 : index
    %3 = vector.load %arg2[%c0_3, %c12] : memref<2x24xf32, #tpu.memory_space<vmem>>, vector<2x12xf32>
    tpu.vector_store %arg2[%c0_3, %c12], %1 {strides = array<i32>} : memref<2x24xf32, #tpu.memory_space<vmem>>, vector<2x12xf32>,
    return
  }
  func.func @transform_0(%arg0: i32) -> (i32, i32) {
    %c0_i32 = arith.constant 0 : i32
    %c0_i32_0 = arith.constant 0 : i32
    return %arg0, %c0_i32 : i32, i32
  }
  func.func @transform_1(%arg0: i32) -> (i32, i32) {
    %c0_i32 = arith.constant 0 : i32
    %c0_i32_0 = arith.constant 0 : i32
    return %arg0, %c0_i32 : i32, i32
  }
}

</mosaic_0001>

<llo_original>
// kernel: tpu_custom_call.1
$region0: #{tpu_custom_call.1}
  #allocation0 [shape = 'u32[]', space=smem, size = 0x4, offset = 0x4, fixed_abs, tag = 'smem constant byte address 0x4 - core index']
  #allocation1 [shape = 'u32[144,128]{1,0:T(1,128)}', space=vmem, size = 0x12000, scoped, tag = 'internal scratch']
  %s0 = inlined_call_operand.hbm [shape: f32[2,12], index: 0, kind: input, shape index: {}]
  %s1 = inlined_call_operand.hbm [shape: f32[2,24], index: 1, kind: output, shape index: {}]
  %s2 = sld [smem:[#allocation0]]
  $region18: #{tpu_custom_call.1} parent=0
    _
  %s4 = ssub.s32 1, %s2
  %s5 = scalar_select 0, %s4, %s2
  $region1: #{tpu_custom_call.1} parent=0
    #allocation2 [shape = 'u8[1024]{0}', space=vmem, size = 0x400, scoped, tag = 'input window, operand 0, single buffered']
    #allocation3 [shape = 's32[1]{0}', space=sflag, size = 0x4, scoped, tag = 'scoped memory for tpu_custom_call.1']
    #allocation4 [shape = 's32[1]{0}', space=sflag, size = 0x4, scoped, tag = 'scoped memory for tpu_custom_call.1']
    #allocation5 [shape = 'u8[1024]{0}', space=vmem, size = 0x400, scoped, tag = 'output window, operand 0, single buffered']
    %6 = vsyncpa [#allocation3], 0
    %7 = vsyncpa [#allocation4], 0
    // Predicated region
    $region2: #{tpu_custom_call.1} parent=1 // pred_check
      _
    $region3: #{tpu_custom_call.1} parent=1 // pred_check_branch
      %9 = sbr.rel (0) target = $region5
    $region4: #{tpu_custom_call.1} parent=1 // pred_region
      %s11 = ssub.s32 32, 32
      %12 = vsyncadd [#allocation3], %s11
      %s14 = sshll.u32 [#allocation2], 4
      %s15 = int_to_ptr.vmem [resolvable:$true] %s14
      %17 = dma.hbm_to_vmem [thread:$0]  %s0, 32, %s15, [#allocation3]
    $region5: #{tpu_custom_call.1} parent=1 // pred_fallthru
      _
    // Predicated region
    $region6: #{tpu_custom_call.1} parent=1 // pred_check
      _
    $region7: #{tpu_custom_call.1} parent=1 // pred_check_branch
      %19 = sbr.rel (0) target = $region9
    $region8: #{tpu_custom_call.1} parent=1 // pred_region
      %20 = dma.done [#allocation3], 32
    $region9: #{tpu_custom_call.1} parent=1 // pred_fallthru
      _
    %v21 = vld [vmem:[#allocation2] sm:$0x3]
    %v22 = vtanh.pop %v21
    %vm23 = vcmask 91136
    %24 = vst.msk [vmem:[#allocation5] sm:$0x3] %vm23, %v22
    %26 = vrot.lane.b32.xlu0 %v22, 12
    %v27 = vpop.permute.xlu0 %26
    %vm29 = vcmask 189536
    %30 = vst.msk [vmem:[#allocation5] sm:$0x3] %vm29, %v27
    // Predicated region
    $region10: #{tpu_custom_call.1} parent=1 // pred_check
      _
    $region11: #{tpu_custom_call.1} parent=1 // pred_check_branch
      %32 = sbr.rel (0) target = $region13
    $region12: #{tpu_custom_call.1} parent=1 // pred_region
      %s34 = ssub.s32 32, 32
      %35 = vsyncadd [#allocation4], %s34
      %s37 = sshll.u32 [#allocation5], 4
      %s38 = int_to_ptr.vmem [resolvable:$true] %s37
      %40 = dma.vmem_to_hbm [thread:$0]  %s38, 32, %s1, [#allocation4]
    $region13: #{tpu_custom_call.1} parent=1 // pred_fallthru
      _
    // Predicated region
    $region14: #{tpu_custom_call.1} parent=1 // pred_check
      _
    $region15: #{tpu_custom_call.1} parent=1 // pred_check_branch
      %42 = sbr.rel (0) target = $region17
    $region16: #{tpu_custom_call.1} parent=1 // pred_region
      %43 = dma.done [#allocation4], 32
    $region17: #{tpu_custom_call.1} parent=1 // pred_fallthru
      _
    %44 = vsyncpa [#allocation3], 1
    %45 = vsyncpa [#allocation4], 1

</llo_original>
